<compile_context>
chip_gen: v6e
topology: v6e:2x2x1
jax: 0.10.0
libtpu: 0.0.40
codegen_flags: <defaults>
</compile_context>

<pallas_src>
import functools
import math

import jax
import jax.numpy as jnp
from jax.experimental import pallas as pl
from jax.experimental.pallas import tpu as pltpu


# ----------------------------------------------------------------------------
# Tile helper
# ----------------------------------------------------------------------------

def _pick_tile(dim, target, align):
    """Largest multiple of `align` that is <= target and divides `dim`;
    falls back to the full dim (always legal for BlockSpec)."""
    if dim <= target:
        return dim
    t = (min(target, dim) // align) * align
    while t >= align:
        if dim % t == 0:
            return t
        t -= align
    return dim


_VMEM_LIMIT = 32 * 1024 * 1024  # safe on v5e/v6e/v7x scoped-VMEM budgets


# ----------------------------------------------------------------------------
# Pallas kernels
# ----------------------------------------------------------------------------

def _linear_kernel(x_ref, w_ref, b_ref, o_ref, acc_ref, *, relu):
    @pl.when(pl.program_id(2) == 0)
    def _():
        acc_ref[...] = jnp.zeros_like(acc_ref)

    acc_ref[...] += jnp.dot(x_ref[...].astype(jnp.bfloat16),
                            w_ref[...].astype(jnp.bfloat16),
                            preferred_element_type=jnp.float32)

    @pl.when(pl.program_id(2) == pl.num_programs(2) - 1)
    def _():
        y = acc_ref[...] + b_ref[...]
        if relu:
            y = jnp.maximum(y, 0.0)
        o_ref[...] = y.astype(o_ref.dtype)


def pallas_linear(x2d, w, b, relu=False, tm=None, tn=None, tk=None):
    """x2d: [M, K], w: [K, N], b: [N] -> [M, N]  (bf16 MXU, f32 accumulation)."""
    M, K = x2d.shape
    N = w.shape[1]
    tm = _pick_tile(M, tm or 256, 8)
    tn = _pick_tile(N, tn or 256, 128)
    tk = _pick_tile(K, tk or 512, 128)
    grid = (M // tm, N // tn, K // tk)
    return pl.pallas_call(
        functools.partial(_linear_kernel, relu=relu),
        out_shape=jax.ShapeDtypeStruct((M, N), x2d.dtype),
        grid_spec=pltpu.PrefetchScalarGridSpec(
            num_scalar_prefetch=0,
            grid=grid,
            in_specs=[
                pl.BlockSpec((tm, tk), lambda i, j, k: (i, k)),
                pl.BlockSpec((tk, tn), lambda i, j, k: (k, j)),
                pl.BlockSpec((1, tn), lambda i, j, k: (0, j)),
            ],
            out_specs=pl.BlockSpec((tm, tn), lambda i, j, k: (i, j)),
            scratch_shapes=[pltpu.VMEM((tm, tn), jnp.float32)]),
        compiler_params=pltpu.CompilerParams(
            dimension_semantics=("parallel", "parallel", "arbitrary"),
            vmem_limit_bytes=_VMEM_LIMIT),
        cost_estimate=pl.CostEstimate(
            flops=2 * M * N * K, transcendentals=0,
            bytes_accessed=4 * (M * K + K * N + M * N)),
    )(x2d, w, b.reshape(1, N))


def _add_ln_kernel(x_ref, r_ref, g_ref, b_ref, o_ref, *, eps):
    x = x_ref[...].astype(jnp.float32) + r_ref[...].astype(jnp.float32)
    mu = jnp.mean(x, axis=-1, keepdims=True)
    var = jnp.mean(jnp.square(x - mu), axis=-1, keepdims=True)
    y = (x - mu) * jax.lax.rsqrt(var + eps)
    o_ref[...] = (y * g_ref[...] + b_ref[...]).astype(o_ref.dtype)


def pallas_add_layernorm(x2d, r2d, gamma, beta, eps=1e-5, tm=None):
    """LayerNorm(x + residual), row tiled.  x2d/r2d: [M, D]."""
    M, D = x2d.shape
    tm = _pick_tile(M, tm or 512, 8)
    return pl.pallas_call(
        functools.partial(_add_ln_kernel, eps=eps),
        out_shape=jax.ShapeDtypeStruct((M, D), x2d.dtype),
        grid=(M // tm,),
        in_specs=[
            pl.BlockSpec((tm, D), lambda i: (i, 0)),
            pl.BlockSpec((tm, D), lambda i: (i, 0)),
            pl.BlockSpec((1, D), lambda i: (0, 0)),
            pl.BlockSpec((1, D), lambda i: (0, 0)),
        ],
        out_specs=pl.BlockSpec((tm, D), lambda i: (i, 0)),
        compiler_params=pltpu.CompilerParams(
            dimension_semantics=("parallel",),
            vmem_limit_bytes=_VMEM_LIMIT),
    )(x2d, r2d, gamma.reshape(1, D), beta.reshape(1, D))


def _flash_attn_kernel(*refs, scale, mask_mode):
    if mask_mode == "none":
        q_ref, k_ref, v_ref, o_ref, m_sc, l_sc, acc_sc = refs
        mask_ref = None
    else:
        q_ref, k_ref, v_ref, mask_ref, o_ref, m_sc, l_sc, acc_sc = refs

    ki = pl.program_id(2)

    @pl.when(ki == 0)
    def _():
        m_sc[...] = jnp.full(m_sc.shape, -jnp.inf, dtype=jnp.float32)
        l_sc[...] = jnp.zeros_like(l_sc)
        acc_sc[...] = jnp.zeros_like(acc_sc)

    # scale folded into Q before the bf16 cast (keeps it off the (tq,tk) VPU path)
    q = (q_ref[0] * scale).astype(jnp.bfloat16)        # (H, tq, dqk_h)
    k = k_ref[0].astype(jnp.bfloat16)                  # (H, tk, dqk_h)
    s = jnp.einsum("hqd,hkd->hqk", q, k,
                   preferred_element_type=jnp.float32)  # (H, tq, tk)

    if mask_mode == "2d":          # shared [Lq, Lk] mask (e.g. causal)
        s = jnp.where(mask_ref[...][None, :, :] != 0, jnp.float32(-1e20), s)
    elif mask_mode == "3d":        # per-batch [B, Lq, Lk] padding mask
        s = jnp.where(mask_ref[0][None, :, :] != 0, jnp.float32(-1e20), s)

    m_prev = m_sc[...]
    m_new = jnp.maximum(m_prev, jnp.max(s, axis=-1, keepdims=True))
    alpha = jnp.exp(m_prev - m_new)
    p = jnp.exp(s - m_new)
    l_sc[...] = alpha * l_sc[...] + jnp.sum(p, axis=-1, keepdims=True)
    acc_sc[...] = alpha * acc_sc[...] + jnp.einsum(
        "hqk,hkd->hqd", p.astype(jnp.bfloat16), v_ref[0].astype(jnp.bfloat16),
        preferred_element_type=jnp.float32)
    m_sc[...] = m_new

    @pl.when(ki == pl.num_programs(2) - 1)
    def _():
        o_ref[0] = (acc_sc[...] *
                    pl.reciprocal(l_sc[...], approx=True)).astype(o_ref.dtype)


def pallas_flash_attention(q, k, v, mask, mask_mode, scale, tq=None, tk=None):
    """q/k: [B, H, L, dqk_h], v: [B, H, Lk, dv_h]; mask: None | [Lq,Lk] | [B,Lq,Lk]."""
    B, H, Lq, dqk_h = q.shape
    Lk = k.shape[2]
    dv_h = v.shape[3]
    tq = _pick_tile(Lq, tq or 128, 8)
    tk = _pick_tile(Lk, tk or 128, 128)
    grid = (B, Lq // tq, Lk // tk)

    in_specs = [
        pl.BlockSpec((1, H, tq, dqk_h), lambda b, qi, ki: (b, 0, qi, 0)),
        pl.BlockSpec((1, H, tk, dqk_h), lambda b, qi, ki: (b, 0, ki, 0)),
        pl.BlockSpec((1, H, tk, dv_h), lambda b, qi, ki: (b, 0, ki, 0)),
    ]
    inputs = [q, k, v]
    if mask_mode == "2d":
        in_specs.append(pl.BlockSpec((tq, tk), lambda b, qi, ki: (qi, ki)))
        inputs.append(mask)
    elif mask_mode == "3d":
        in_specs.append(pl.BlockSpec((1, tq, tk), lambda b, qi, ki: (b, qi, ki)))
        inputs.append(mask)

    flops = 2 * B * H * Lq * Lk * (dqk_h + dv_h)
    bytes_accessed = 4 * B * H * (Lq * dqk_h + Lk * dqk_h + Lk * dv_h + Lq * dv_h)

    return pl.pallas_call(
        functools.partial(_flash_attn_kernel, scale=scale, mask_mode=mask_mode),
        out_shape=jax.ShapeDtypeStruct((B, H, Lq, dv_h), q.dtype),
        grid_spec=pltpu.PrefetchScalarGridSpec(
            num_scalar_prefetch=0,
            grid=grid,
            in_specs=in_specs,
            out_specs=pl.BlockSpec((1, H, tq, dv_h),
                                   lambda b, qi, ki: (b, 0, qi, 0)),
            scratch_shapes=[
                pltpu.VMEM((H, tq, 1), jnp.float32),   # running max
                pltpu.VMEM((H, tq, 1), jnp.float32),   # running denom
                pltpu.VMEM((H, tq, dv_h), jnp.float32),  # accumulator
            ]),
        compiler_params=pltpu.CompilerParams(
            dimension_semantics=("parallel", "parallel", "arbitrary"),
            vmem_limit_bytes=_VMEM_LIMIT),
        cost_estimate=pl.CostEstimate(
            flops=flops, transcendentals=B * H * Lq * Lk,
            bytes_accessed=bytes_accessed),
    )(*inputs)


# ----------------------------------------------------------------------------
# Matched-precision pure-JAX references (bf16-in / f32-acc like the kernels)
# ----------------------------------------------------------------------------

def ref_linear(x2d, w, b, relu=False):
    y = jnp.dot(x2d.astype(jnp.bfloat16), w.astype(jnp.bfloat16),
                preferred_element_type=jnp.float32) + b
    return jnp.maximum(y, 0.0) if relu else y


def ref_add_layernorm(x2d, r2d, gamma, beta, eps=1e-5):
    x = x2d + r2d
    mu = jnp.mean(x, axis=-1, keepdims=True)
    var = jnp.mean(jnp.square(x - mu), axis=-1, keepdims=True)
    return (x - mu) * jax.lax.rsqrt(var + eps) * gamma + beta


def ref_attention(q, k, v, mask, mask_mode, scale):
    qs = (q * scale).astype(jnp.bfloat16)
    s = jnp.einsum("bhqd,bhkd->bhqk", qs, k.astype(jnp.bfloat16),
                   preferred_element_type=jnp.float32)
    if mask_mode == "2d":
        s = jnp.where(mask[None, None] != 0, jnp.float32(-1e20), s)
    elif mask_mode == "3d":
        s = jnp.where(mask[:, None] != 0, jnp.float32(-1e20), s)
    m = jnp.max(s, axis=-1, keepdims=True)
    p = jnp.exp(s - m)
    l = jnp.sum(p, axis=-1, keepdims=True)
    o = jnp.einsum("bhqk,bhkd->bhqd", p.astype(jnp.bfloat16),
                   v.astype(jnp.bfloat16), preferred_element_type=jnp.float32)
    return o / l


PALLAS_OPS = dict(linear=pallas_linear, add_ln=pallas_add_layernorm,
                  attn=pallas_flash_attention)
REF_OPS = dict(linear=ref_linear, add_ln=ref_add_layernorm, attn=ref_attention)


# ----------------------------------------------------------------------------
# Model (functional, mirroring the PyTorch module; dropout=0 -> identity)
# ----------------------------------------------------------------------------

def sinusoidal_pe(emb_dim, max_len, freq=10000.0):
    pos = jnp.arange(max_len, dtype=jnp.float32)[:, None]
    div = jnp.power(freq, jnp.arange(0, emb_dim, 2, dtype=jnp.float32) / emb_dim)
    pe = jnp.zeros((max_len, emb_dim), jnp.float32)
    pe = pe.at[:, 0::2].set(jnp.sin(pos / div))
    pe = pe.at[:, 1::2].set(jnp.cos(pos / div))   # emb_dim assumed even
    return pe


def mha_forward(p, q_in, k_in, v_in, mask, cfg, ops):
    B, Lq, D = q_in.shape
    Lk = k_in.shape[1]
    H, dqk, dv = cfg["num_heads"], cfg["dim_qk"], cfg["dim_v"]
    dqk_h, dv_h = dqk // H, dv // H

    if q_in is k_in and k_in is v_in:            # self-attention: fused QKV matmul
        w = jnp.concatenate([p["wq"], p["wk"], p["wv"]], axis=1)
        b = jnp.concatenate([p["bq"], p["bk"], p["bv"]], axis=0)
        qkv = ops["linear"](q_in.reshape(B * Lq, D), w, b)
        qp, kp, vp = qkv[:, :dqk], qkv[:, dqk:2 * dqk], qkv[:, 2 * dqk:]
    elif k_in is v_in:                           # cross-attention: fused KV matmul
        qp = ops["linear"](q_in.reshape(B * Lq, D), p["wq"], p["bq"])
        w = jnp.concatenate([p["wk"], p["wv"]], axis=1)
        b = jnp.concatenate([p["bk"], p["bv"]], axis=0)
        kv = ops["linear"](k_in.reshape(B * Lk, D), w, b)
        kp, vp = kv[:, :dqk], kv[:, dqk:]
    else:
        qp = ops["linear"](q_in.reshape(B * Lq, D), p["wq"], p["bq"])
        kp = ops["linear"](k_in.reshape(B * Lk, D), p["wk"], p["bk"])
        vp = ops["linear"](v_in.reshape(B * Lk, D), p["wv"], p["bv"])

    qh = qp.reshape(B, Lq, H, dqk_h).transpose(0, 2, 1, 3)
    kh = kp.reshape(B, Lk, H, dqk_h).transpose(0, 2, 1, 3)
    vh = vp.reshape(B, Lk, H, dv_h).transpose(0, 2, 1, 3)

    if mask is None:
        mask_arr, mask_mode = None, "none"
    elif mask.ndim == 2:                          # [Lq, Lk] shared (causal) mask
        mask_arr, mask_mode = mask.astype(jnp.int32), "2d"
    else:                                         # [B, Lq, Lk] padding mask
        mask_arr, mask_mode = mask.astype(jnp.int32), "3d"

    scale = 1.0 / math.sqrt(dqk)   # PyTorch: attn / dim_qk**0.5 (full dim_qk)
    o = ops["attn"](qh, kh, vh, mask_arr, mask_mode, scale)
    return o.transpose(0, 2, 1, 3).reshape(B, Lq, dv)


def ffn_forward(p, x, ops):
    B, L, D = x.shape
    h = ops["linear"](x.reshape(B * L, D), p["w1"], p["b1"], relu=True)
    y = ops["linear"](h, p["w2"], p["b2"])
    return y.reshape(B, L, D)


def add_ln_forward(pln, x, res, ops):
    B, L, D = x.shape
    return ops["add_ln"](x.reshape(B * L, D), res.reshape(B * L, D),
                         pln["g"], pln["b"]).reshape(B, L, D)


def encoder_layer(p, x, mask, cfg, ops):
    a = mha_forward(p["attn"], x, x, x, mask, cfg, ops)
    x = add_ln_forward(p["ln1"], a, x, ops)        # LN(attn(x) + x)
    f = ffn_forward(p["ffn"], x, ops)
    x = add_ln_forward(p["ln2"], f, x, ops)        # LN(ffn(x) + x)
    return x


def decoder_layer(p, x, enc, self_mask, pad_mask, cfg, ops):
    a = mha_forward(p["attn1"], x, x, x, self_mask, cfg, ops)
    x = add_ln_forward(p["ln1"], a, x, ops)
    a = mha_forward(p["attn2"], x, enc, enc, pad_mask, cfg, ops)
    x = add_ln_forward(p["ln2"], a, x, ops)
    f = ffn_forward(p["ffn"], x, ops)
    x = add_ln_forward(p["ln3"], f, x, ops)
    return x


def transformer_forward(params, cfg, src, tgt,
                        src_mask=None, tgt_mask=None, pad_mask=None,
                        ops=PALLAS_OPS):
    emb = params["embedding"]
    pe = params["pe"]

    x = jnp.take(emb, src, axis=0) + pe[: src.shape[1], :]
    for lp in params["encoder"]:
        x = encoder_layer(lp, x, src_mask, cfg, ops)
    enc = x

    y = jnp.take(emb, tgt, axis=0) + pe[: tgt.shape[1], :]
    for lp in params["decoder"]:
        y = decoder_layer(lp, y, enc, tgt_mask, pad_mask, cfg, ops)

    B, T, D = y.shape
    logits = ops["linear"](y.reshape(B * T, D), params["out_w"], params["out_b"])
    logits = logits[:, : cfg["vocab"]]            # drop 128-lane padding columns
    return logits.reshape(B, T, cfg["vocab"])


# ----------------------------------------------------------------------------
# Deterministic parameter init (shapes from the PyTorch __init__)
# ----------------------------------------------------------------------------

def init_linear_params(key, din, dout):
    kw, kb = jax.random.split(key)
    lim = 1.0 / math.sqrt(din)
    w = jax.random.uniform(kw, (din, dout), jnp.float32, -lim, lim)
    b = jax.random.uniform(kb, (dout,), jnp.float32, -lim, lim)
    return w, b


def init_mha_params(key, dim, dim_qk, dim_v):
    k1, k2, k3 = jax.random.split(key, 3)
    wq, bq = init_linear_params(k1, dim, dim_qk)
    wk, bk = init_linear_params(k2, dim, dim_qk)
    wv, bv = init_linear_params(k3, dim, dim_v)
    return dict(wq=wq, bq=bq, wk=wk, bk=bk, wv=wv, bv=bv)


def init_ffn_params(key, dim, hidden):
    k1, k2 = jax.random.split(key)
    w1, b1 = init_linear_params(k1, dim, hidden)
    w2, b2 = init_linear_params(k2, hidden, dim)
    return dict(w1=w1, b1=b1, w2=w2, b2=b2)


def init_ln_params(dim):
    return dict(g=jnp.ones((dim,), jnp.float32), b=jnp.zeros((dim,), jnp.float32))


def init_transformer(key, dim, vocab, num_heads, num_layers):
    dim_qk = dim // num_heads
    dim_v = dim
    keys = jax.random.split(key, 2 + 2 * num_layers)
    params = {}
    params["embedding"] = jax.random.normal(keys[0], (vocab, dim), jnp.float32)
    params["pe"] = sinusoidal_pe(dim, 100)

    enc_layers = []
    for i in range(num_layers):
        ka, kf = jax.random.split(keys[1 + i])
        enc_layers.append(dict(
            attn=init_mha_params(ka, dim, dim_qk, dim_v),
            ffn=init_ffn_params(kf, dim, dim * 4),
            ln1=init_ln_params(dim), ln2=init_ln_params(dim)))
    params["encoder"] = enc_layers

    dec_layers = []
    for i in range(num_layers):
        ka1, ka2, kf = jax.random.split(keys[1 + num_layers + i], 3)
        dec_layers.append(dict(
            attn1=init_mha_params(ka1, dim, dim_qk, dim_v),
            attn2=init_mha_params(ka2, dim, dim_qk, dim_v),
            ffn=init_ffn_params(kf, dim, dim * 4),
            ln1=init_ln_params(dim), ln2=init_ln_params(dim),
            ln3=init_ln_params(dim)))
    params["decoder"] = dec_layers

    ow, ob = init_linear_params(keys[-1], dim, vocab)
    # pad vocab projection to a multiple of 128 lanes (lane-dense stores)
    pad_n = (-vocab) % 128
    params["out_w"] = jnp.pad(ow, ((0, 0), (0, pad_n)))
    params["out_b"] = jnp.pad(ob, (0, pad_n))
    cfg = dict(num_heads=num_heads, dim_qk=dim_qk, dim_v=dim_v, vocab=vocab)
    return params, cfg


# ----------------------------------------------------------------------------
# Main
# ----------------------------------------------------------------------------

if __name__ == "__main__":
    # --- unit checks exercising the multi-tile grid paths ---------------------
    key = jax.random.PRNGKey(0)
    k1, k2, k3, k4, k5, k6, k7 = jax.random.split(key, 7)

    # tiled linear with K-reduction: grid (2, 3, 2)
    xa = jax.random.normal(k1, (256, 256), jnp.float32)
    wa = jax.random.normal(k2, (256, 384), jnp.float32) * 0.05
    ba = jax.random.normal(k3, (384,), jnp.float32) * 0.05
    out_lin = jax.block_until_ready(
        pallas_linear(xa, wa, ba, relu=True, tm=128, tn=128, tk=128))
    ref_lin = ref_linear(xa, wa, ba, relu=True)
    err = float(jnp.max(jnp.abs(out_lin - ref_lin)))
    assert jnp.allclose(out_lin, ref_lin, atol=2e-2, rtol=2e-2), err

    # row-tiled fused add+LayerNorm: grid (4,)
    xb = jax.random.normal(k4, (128, 256), jnp.float32)
    rb = jax.random.normal(k5, (128, 256), jnp.float32)
    gb = jnp.ones((256,), jnp.float32)
    bb = jnp.zeros((256,), jnp.float32)
    out_ln = jax.block_until_ready(pallas_add_layernorm(xb, rb, gb, bb, tm=32))
    ref_ln = ref_add_layernorm(xb, rb, gb, bb)
    err = float(jnp.max(jnp.abs(out_ln - ref_ln)))
    assert jnp.allclose(out_ln, ref_ln, atol=2e-2, rtol=2e-2), err

    # flash attention with causal mask, multi k-tile: grid (2, 2, 2)
    qf = jax.random.normal(k6, (2, 2, 256, 64), jnp.float32)
    kf = jax.random.normal(k7, (2, 2, 256, 64), jnp.float32)
    vf = jax.random.normal(k1, (2, 2, 256, 64), jnp.float32)
    cmask = jnp.triu(jnp.ones((256, 256), jnp.int32), 1)
    sc = 1.0 / math.sqrt(64)
    out_att = jax.block_until_ready(
        pallas_flash_attention(qf, kf, vf, cmask, "2d", sc, tq=128, tk=128))
    ref_att = ref_attention(qf, kf, vf, cmask, "2d", sc)
    err = float(jnp.max(jnp.abs(out_att - ref_att)))
    assert jnp.allclose(out_att, ref_att, atol=2e-2, rtol=2e-2), err

    # --- full transformer forward (small demo shapes) -------------------------
    B, S, T = 2, 8, 8
    dim, vocab, num_heads, num_layers = 32, 50, 2, 2

    root = jax.random.PRNGKey(0)
    kparam, ksrc, ktgt = jax.random.split(root, 3)
    params, cfg = init_transformer(kparam, dim, vocab, num_heads, num_layers)

    src = jax.random.randint(ksrc, (B, S), 0, vocab, dtype=jnp.int32)
    tgt = jax.random.randint(ktgt, (B, T), 0, vocab, dtype=jnp.int32)
    # causal self-attention mask for the decoder (attn_mask(T) in the PyTorch code)
    tgt_mask = jnp.triu(jnp.ones((T, T), dtype=jnp.int32), 1)

    # TODO(synk): dropout layers are identity at p=0.0 (eval semantics); no RNG path.
    pallas_fwd = jax.jit(lambda prm, s_, t_, m_: transformer_forward(
        prm, cfg, s_, t_, src_mask=None, tgt_mask=m_, pad_mask=None, ops=PALLAS_OPS))
    ref_fwd = jax.jit(lambda prm, s_, t_, m_: transformer_forward(
        prm, cfg, s_, t_, src_mask=None, tgt_mask=m_, pad_mask=None, ops=REF_OPS))

    out = jax.block_until_ready(pallas_fwd(params, src, tgt, tgt_mask))
    ref = jax.block_until_ready(ref_fwd(params, src, tgt, tgt_mask))

    assert out.shape == (B, T, vocab), out.shape
    err = float(jnp.max(jnp.abs(out - ref)))
    assert jnp.allclose(out, ref, atol=3e-2, rtol=3e-2), err
    print("KERNEL_OK")
</pallas_src>

<mosaic_0001>
module attributes {stable_mosaic.version = 11 : i64} {
  func.func @_linear_kernel(%arg0: i32, %arg1: i32, %arg2: i32, %arg3: memref<128x128xf32, #tpu.memory_space<vmem>>, %arg4: memref<128x128xf32, #tpu.memory_space<vmem>>, %arg5: memref<1x128xf32, #tpu.memory_space<vmem>>, %arg6: memref<128x128xf32, #tpu.memory_space<vmem>>, %arg7: memref<128x128xf32, #tpu.memory_space<vmem>>) attributes {dimension_semantics = [#tpu.dimension_semantics<parallel>, #tpu.dimension_semantics<parallel>, #tpu.dimension_semantics<arbitrary>], iteration_bounds = array<i64: 2, 3, 2>, scalar_prefetch = 0 : i64, scratch_operands = 1 : i64, tpu.core_type = #tpu.core_type<tc>, window_params = [{transform_indices = @transform_0, window_bounds = array<i64: 128, 128>}, {transform_indices = @transform_1, window_bounds = array<i64: 128, 128>}, {transform_indices = @transform_2, window_bounds = array<i64: 1, 128>}, {transform_indices = @transform_3, window_bounds = array<i64: 128, 128>}]} {
    %c0_i32 = arith.constant 0 : i32
    %0 = arith.cmpi eq, %arg2, %c0_i32 : i32
    %1 = arith.extui %0 : i1 to i32
    %c0_i32_0 = arith.constant 0 : i32
    %2 = arith.cmpi ne, %1, %c0_i32_0 : i32
    scf.if %2 {
      %cst_9 = arith.constant 0.000000e+00 : f32
      %14 = vector.broadcast %cst_9 : f32 to vector<128x128xf32>
      %c0_10 = arith.constant 0 : index
      %c0_11 = arith.constant 0 : index
      %15 = vector.load %arg7[%c0_10, %c0_11] : memref<128x128xf32, #tpu.memory_space<vmem>>, vector<128x128xf32>
      tpu.vector_store %arg7[%c0_10, %c0_11], %14 {strides = array<i32>} : memref<128x128xf32, #tpu.memory_space<vmem>>, vector<128x128xf32>,
    } else {
    }
    %c0 = arith.constant 0 : index
    %c0_1 = arith.constant 0 : index
    %3 = vector.load %arg7[%c0, %c0_1] : memref<128x128xf32, #tpu.memory_space<vmem>>, vector<128x128xf32>
    %c0_2 = arith.constant 0 : index
    %c0_3 = arith.constant 0 : index
    %4 = vector.load %arg3[%c0_2, %c0_3] : memref<128x128xf32, #tpu.memory_space<vmem>>, vector<128x128xf32>
    %5 = arith.truncf %4 : vector<128x128xf32> to vector<128x128xbf16>
    %c0_4 = arith.constant 0 : index
    %c0_5 = arith.constant 0 : index
    %6 = vector.load %arg4[%c0_4, %c0_5] : memref<128x128xf32, #tpu.memory_space<vmem>>, vector<128x128xf32>
    %7 = arith.truncf %6 : vector<128x128xf32> to vector<128x128xbf16>
    %cst = arith.constant dense<0.000000e+00> : vector<128x128xf32>
    %8 = tpu.matmul %5, %7, %cst {dimension_numbers = #tpu.dot_dimension_numbers<[1], [0], [0], [1], [0, 0, 1, 1], [], []>} : vector<128x128xbf16>, vector<128x128xbf16>, vector<128x128xf32> -> vector<128x128xf32>
    %9 = arith.addf %3, %8 : vector<128x128xf32>
    %c0_6 = arith.constant 0 : index
    %c0_7 = arith.constant 0 : index
    %10 = vector.load %arg7[%c0_6, %c0_7] : memref<128x128xf32, #tpu.memory_space<vmem>>, vector<128x128xf32>
    tpu.vector_store %arg7[%c0_6, %c0_7], %9 {strides = array<i32>} : memref<128x128xf32, #tpu.memory_space<vmem>>, vector<128x128xf32>,
    %c1_i32 = arith.constant 1 : i32
    %11 = arith.cmpi eq, %arg2, %c1_i32 : i32
    %12 = arith.extui %11 : i1 to i32
    %c0_i32_8 = arith.constant 0 : i32
    %13 = arith.cmpi ne, %12, %c0_i32_8 : i32
    scf.if %13 {
      %c0_9 = arith.constant 0 : index
      %c0_10 = arith.constant 0 : index
      %14 = vector.load %arg7[%c0_9, %c0_10] : memref<128x128xf32, #tpu.memory_space<vmem>>, vector<128x128xf32>
      %c0_11 = arith.constant 0 : index
      %c0_12 = arith.constant 0 : index
      %15 = vector.load %arg5[%c0_11, %c0_12] : memref<1x128xf32, #tpu.memory_space<vmem>>, vector<1x128xf32>
      %16 = vector.broadcast %15 : vector<1x128xf32> to vector<128x128xf32>
      %17 = arith.addf %14, %16 : vector<128x128xf32>
      %cst_13 = arith.constant 0.000000e+00 : f32
      %18 = vector.broadcast %cst_13 : f32 to vector<128x128xf32>
      %19 = arith.maximumf %17, %18 : vector<128x128xf32>
      %c0_14 = arith.constant 0 : index
      %c0_15 = arith.constant 0 : index
      %20 = vector.load %arg6[%c0_14, %c0_15] : memref<128x128xf32, #tpu.memory_space<vmem>>, vector<128x128xf32>
      tpu.vector_store %arg6[%c0_14, %c0_15], %19 {strides = array<i32>} : memref<128x128xf32, #tpu.memory_space<vmem>>, vector<128x128xf32>,
    } else {
    }
    return
  }
  func.func @transform_0(%arg0: i32, %arg1: i32, %arg2: i32) -> (i32, i32) {
    %c0_i32 = arith.constant 0 : i32
    return %arg0, %arg2 : i32, i32
  }
  func.func @transform_1(%arg0: i32, %arg1: i32, %arg2: i32) -> (i32, i32) {
    %c0_i32 = arith.constant 0 : i32
    return %arg2, %arg1 : i32, i32
  }
  func.func @transform_2(%arg0: i32, %arg1: i32, %arg2: i32) -> (i32, i32) {
    %c0_i32 = arith.constant 0 : i32
    %c0_i32_0 = arith.constant 0 : i32
    return %c0_i32, %arg1 : i32, i32
  }
  func.func @transform_3(%arg0: i32, %arg1: i32, %arg2: i32) -> (i32, i32) {
    %c0_i32 = arith.constant 0 : i32
    return %arg0, %arg1 : i32, i32
  }
}

</mosaic_0001>

<llo_original>
// kernel: tpu_custom_call.1
$region0: #{tpu_custom_call.1}
  #allocation0 [shape = 'u32[]', space=smem, size = 0x4, offset = 0x4, fixed_abs, tag = 'smem constant byte address 0x4 - core index']
  #allocation1 [shape = 'u32[144,128]{1,0:T(1,128)}', space=vmem, size = 0x12000, scoped, tag = 'internal scratch']
  #allocation2 [shape = 'f32[128,128]{1,0:T(8,128)}', space=vmem, size = 0x10000, scoped, tag = 'scratch operand']
  %s0 = inlined_call_operand.hbm [shape: f32[256,256], index: 0, kind: input, shape index: {}]
  %s1 = inlined_call_operand.hbm [shape: f32[256,384], index: 1, kind: input, shape index: {}]
  %s2 = inlined_call_operand.vmem [shape: f32[1,384], index: 2, kind: input, shape index: {}]
  %s3 = inlined_call_operand.hbm [shape: f32[256,384], index: 3, kind: output, shape index: {}]
  %s4 = sld [smem:[#allocation0]]
  $region61: #{tpu_custom_call.1} parent=0
    _
  %s6 = ssub.s32 1, %s4
  %s7 = scalar_select 0, %s6, %s4
  $region1: #{tpu_custom_call.1} parent=0
    #allocation3 [shape = 'u8[131072]{0}', space=vmem, size = 0x20000, scoped, tag = 'input window, operand 0']
    #allocation4 [shape = 's32[2]{0}', space=sflag, size = 0x8, scoped, tag = 'scoped memory for tpu_custom_call.1']
    #allocation5 [shape = 's32[2]{0}', space=sflag, size = 0x8, scoped, tag = 'scoped memory for tpu_custom_call.1']
    #allocation6 [shape = 'u8[131072]{0}', space=vmem, size = 0x20000, scoped, tag = 'input window, operand 1']
    #allocation7 [shape = 's32[2]{0}', space=sflag, size = 0x8, scoped, tag = 'scoped memory for tpu_custom_call.1']
    #allocation8 [shape = 'u8[131072]{0}', space=vmem, size = 0x20000, scoped, tag = 'output window, operand 0']
    %8 = vsyncpa [#allocation4], 0
    %s9 = scalar_lea.sflag [#allocation4], 1
    %10 = vsyncpa %s9, 0
    %11 = vsyncpa [#allocation7], 0
    %s12 = scalar_lea.sflag [#allocation7], 1
    %13 = vsyncpa %s12, 0
    %14 = vsyncpa [#allocation5], 0
    %s15 = scalar_lea.sflag [#allocation5], 1
    %16 = vsyncpa %s15, 0
    loop: start=0, step=1, limit=14
    $region2: #{tpu_custom_call.1} parent=1 // loop_pre_header
      _
    $region3: #{tpu_custom_call.1} parent=1 // loop_header
      %s18 = sphi 0, %s22
      %p19 = scmp.ge.s32.totalorder %s18, 14
      %s25 = sphi 0, %s44
      %s26 = sphi 0, %s40
      %s27 = sphi 0, %s36
      %s28 = sphi 0, %s25
      %s29 = sphi 0, %s26
      %s30 = sphi 0, %s27
      %s31 = sphi 0, %s28
      %s32 = sphi 0, %s29
      %s33 = sphi 0, %s30
      %s49 = sphi 0, %s51
      %s52 = sphi 0, %s49
      %s53 = sphi 0, %s52
      %s69 = sphi 0, %s53
      %s77 = sphi 0, %s79
      %s80 = sphi 0, %s77
      %s81 = sphi 0, %s80
      %s97 = sphi 0, %s81
      %s103 = sphi 0, %s105
      %s106 = sphi 0, %s103
      %s107 = sphi 0, %s106
      %s123 = sphi 0, %s107
      %s131 = sphi 0, %s133
      %s134 = sphi 0, %s131
      %s135 = sphi 0, %s134
      %s151 = sphi 0, %s135
    $region4: #{tpu_custom_call.1} parent=1 // loop_header_branch
      %21 = sbr.rel (%p19) target = $region8
    $region5: #{tpu_custom_call.1} parent=1 // loop_body
      %s23 = ssub.s32 %s18, 1
      %s24 = ssub.s32 %s18, 2
      %s34 = sadd.s32 1, %s27
      %p35 = scmp.ge.s32.totalorder %s34, 2
      %s36 = scalar_select %p35, 0, %s34
      %s37 = sadd.s32 1, %s26
      %s38 = scalar_select %p35, %s37, %s26
      %p39 = scmp.ge.s32.totalorder %s38, 3
      %s40 = scalar_select %p39, 0, %s38
      %s41 = sadd.s32 1, %s25
      %s42 = scalar_select %p39, %s41, %s25
      %p43 = scmp.ge.s32.totalorder %s42, 2
      %s44 = scalar_select %p43, 0, %s42
      %s45 = ssub.s32 %s25, %s44
      %s46 = ssub.s32 %s27, %s36
      %s47 = sor.u32 %s45, %s46
      %p48 = scmp.eq.s32.totalorder %s47, 0
      %s50 = sadd.s32 %s49, 1
      %s51 = scalar_select %p48, %s49, %s50
      %p54 = pneg %p48
      %p55 = scmp.eq.s32.totalorder %s18, 11
      %p56 = por %p54, %p55
      %p57 = scmp.ne.s32.totalorder %s49, %s52
      %p58 = scmp.eq.s32.totalorder %s18, 0
      %p59 = por %p57, %p58
      %p60 = scmp.ne.s32.totalorder %s49, %s52
      %p61 = scmp.eq.s32.totalorder %s23, 11
      %p62 = por %p60, %p61
      %p63 = scmp.ne.s32.totalorder %s52, %s53
      %p64 = scmp.eq.s32.totalorder %s23, 0
      %p65 = por %p63, %p64
      %p66 = scmp.ne.s32.totalorder %s52, %s53
      %p67 = scmp.eq.s32.totalorder %s24, 11
      %p68 = por %p66, %p67
      %p70 = scmp.ne.s32.totalorder %s53, %s69
      %p71 = scmp.eq.s32.totalorder %s24, 0
      %p72 = por %p70, %p71
      %s73 = ssub.s32 %s27, %s36
      %s74 = ssub.s32 %s26, %s40
      %s75 = sor.u32 %s73, %s74
      %p76 = scmp.eq.s32.totalorder %s75, 0
      %s78 = sadd.s32 %s77, 1
      %s79 = scalar_select %p76, %s77, %s78
      %p82 = pneg %p76
      %p83 = scmp.eq.s32.totalorder %s18, 11
      %p84 = por %p82, %p83
      %p85 = scmp.ne.s32.totalorder %s77, %s80
      %p86 = scmp.eq.s32.totalorder %s18, 0
      %p87 = por %p85, %p86
      %p88 = scmp.ne.s32.totalorder %s77, %s80
      %p89 = scmp.eq.s32.totalorder %s23, 11
      %p90 = por %p88, %p89
      %p91 = scmp.ne.s32.totalorder %s80, %s81
      %p92 = scmp.eq.s32.totalorder %s23, 0
      %p93 = por %p91, %p92
      %p94 = scmp.ne.s32.totalorder %s80, %s81
      %p95 = scmp.eq.s32.totalorder %s24, 11
      %p96 = por %p94, %p95
      %p98 = scmp.ne.s32.totalorder %s81, %s97
      %p99 = scmp.eq.s32.totalorder %s24, 0
      %p100 = por %p98, %p99
      %s101 = ssub.s32 %s26, %s40
      %p102 = scmp.eq.s32.totalorder %s101, 0
      %s104 = sadd.s32 %s103, 1
      %s105 = scalar_select %p102, %s103, %s104
      %p108 = pneg %p102
      %p109 = scmp.eq.s32.totalorder %s18, 11
      %p110 = por %p108, %p109
      %p111 = scmp.ne.s32.totalorder %s103, %s106
      %p112 = scmp.eq.s32.totalorder %s18, 0
      %p113 = por %p111, %p112
      %p114 = scmp.ne.s32.totalorder %s103, %s106
      %p115 = scmp.eq.s32.totalorder %s23, 11
      %p116 = por %p114, %p115
      %p117 = scmp.ne.s32.totalorder %s106, %s107
      %p118 = scmp.eq.s32.totalorder %s23, 0
      %p119 = por %p117, %p118
      %p120 = scmp.ne.s32.totalorder %s106, %s107
      %p121 = scmp.eq.s32.totalorder %s24, 11
      %p122 = por %p120, %p121
      %p124 = scmp.ne.s32.totalorder %s107, %s123
      %p125 = scmp.eq.s32.totalorder %s24, 0
      %p126 = por %p124, %p125
      %s127 = ssub.s32 %s25, %s44
      %s128 = ssub.s32 %s26, %s40
      %s129 = sor.u32 %s127, %s128
      %p130 = scmp.eq.s32.totalorder %s129, 0
      %s132 = sadd.s32 %s131, 1
      %s133 = scalar_select %p130, %s131, %s132
      %p136 = pneg %p130
      %p137 = scmp.eq.s32.totalorder %s18, 11
      %p138 = por %p136, %p137
      %p139 = scmp.ne.s32.totalorder %s131, %s134
      %p140 = scmp.eq.s32.totalorder %s18, 0
      %p141 = por %p139, %p140
      %p142 = scmp.ne.s32.totalorder %s131, %s134
      %p143 = scmp.eq.s32.totalorder %s23, 11
      %p144 = por %p142, %p143
      %p145 = scmp.ne.s32.totalorder %s134, %s135
      %p146 = scmp.eq.s32.totalorder %s23, 0
      %p147 = por %p145, %p146
      %p148 = scmp.ne.s32.totalorder %s134, %s135
      %p149 = scmp.eq.s32.totalorder %s24, 11
      %p150 = por %p148, %p149
      %p152 = scmp.ne.s32.totalorder %s135, %s151
      %p153 = scmp.eq.s32.totalorder %s24, 0
      %p154 = por %p152, %p153
      %p155 = scmp.le.s32.totalorder 1, %s18
      %p156 = scmp.lt.s32.totalorder %s18, 13
      %p157 = pnand %p155, %p156
      %p158 = pneg %p157
      // Predicated region
      $region9: #{tpu_custom_call.1} parent=5 // pred_check
        _
      $region10: #{tpu_custom_call.1} parent=5 // pred_check_branch
        %160 = sbr.rel (%p157) target = $region12
      $region11: #{tpu_custom_call.1} parent=5 // pred_region
        %s161 = ssub.s32 %s18, 1
      $region12: #{tpu_custom_call.1} parent=5 // pred_fallthru
        _
      %p162 = scmp.lt.s32.totalorder %s18, 12
      // Predicated region
      $region13: #{tpu_custom_call.1} parent=5 // pred_check
        %p163 = pneg %p162
      $region14: #{tpu_custom_call.1} parent=5 // pred_check_branch
        %165 = sbr.rel (%p163) target = $region16
      $region15: #{tpu_custom_call.1} parent=5 // pred_region
        // Predicated region
        $region17: #{tpu_custom_call.1} parent=15 // pred_check
          %p166 = pneg %p59
        $region18: #{tpu_custom_call.1} parent=15 // pred_check_branch
          %168 = sbr.rel (%p166) target = $region20
        $region19: #{tpu_custom_call.1} parent=15 // pred_region
          %s169 = sand.u32 %s49, 1
          %s170 = scalar_lea.sflag [#allocation4], %s169
          %s171 = sand.u32 %s49, 1
          %s172 = smul.addr %s171, 128
          %s173 = scalar_lea.vmem [#allocation3], %s172
          %s174 = smul.u32 16, %s25
          %s176 = ssub.s32 2048, 2048
          %177 = vsyncadd %s170, %s176
          %s178 = smul.addr %s174, 2
          %s179 = sadd.s32 %s27, %s178
          %s180 = smul.addr %s179, 128
          %s181 = scalar_lea.hbm %s0, %s180
          %s182 = sshll.u32 %s173, 4
          %s183 = int_to_ptr.vmem [resolvable:$true] %s182
          %188 = dma.hbm_to_vmem [thread:$0]  %s181, 2048, %s183, %s170, 256, 128, 8
        $region20: #{tpu_custom_call.1} parent=15 // pred_fallthru
          _
        // Predicated region
        $region21: #{tpu_custom_call.1} parent=15 // pred_check
          %p189 = pneg %p87
        $region22: #{tpu_custom_call.1} parent=15 // pred_check_branch
          %191 = sbr.rel (%p189) target = $region24
        $region23: #{tpu_custom_call.1} parent=15 // pred_region
          %s192 = sand.u32 %s77, 1
          %s193 = scalar_lea.sflag [#allocation7], %s192
          %s194 = sand.u32 %s77, 1
          %s195 = smul.addr %s194, 128
          %s196 = scalar_lea.vmem [#allocation6], %s195
          %s197 = smul.u32 16, %s27
          %s199 = ssub.s32 2048, 2048
          %200 = vsyncadd %s193, %s199
          %s201 = smul.addr %s197, 3
          %s202 = sadd.s32 %s26, %s201
          %s203 = smul.addr %s202, 128
          %s204 = scalar_lea.hbm %s1, %s203
          %s205 = sshll.u32 %s196, 4
          %s206 = int_to_ptr.vmem [resolvable:$true] %s205
          %211 = dma.hbm_to_vmem [thread:$0]  %s204, 2048, %s206, %s193, 384, 128, 8
        $region24: #{tpu_custom_call.1} parent=15 // pred_fallthru
          _
        // Predicated region
        $region25: #{tpu_custom_call.1} parent=15 // pred_check
          %p212 = pneg %p113
        $region26: #{tpu_custom_call.1} parent=15 // pred_check_branch
          %214 = sbr.rel (%p212) target = $region28
        $region27: #{tpu_custom_call.1} parent=15 // pred_region
          %p215 = scmp.lt.s32.totalorder %s26, 2
          %s216 = scalar_select %p215, %s26, 2
          %s217 = scalar_lea.vmem %s2, %s216
        $region28: #{tpu_custom_call.1} parent=15 // pred_fallthru
          _
      $region16: #{tpu_custom_call.1} parent=5 // pred_fallthru
        _
      %p218 = scmp.le.s32.totalorder 1, %s18
      %p219 = scmp.lt.s32.totalorder %s18, 13
      %p220 = pnand %p218, %p219
      %p221 = pneg %p220
      // Predicated region
      $region29: #{tpu_custom_call.1} parent=5 // pred_check
        _
      $region30: #{tpu_custom_call.1} parent=5 // pred_check_branch
        %223 = sbr.rel (%p220) target = $region32
      $region31: #{tpu_custom_call.1} parent=5 // pred_region
        %s224 = ssub.s32 %s18, 1
        %s225 = sand.u32 %s52, 1
        %s226 = scalar_lea.sflag [#allocation4], %s225
        %s227 = sand.u32 %s52, 1
        %s228 = smul.addr %s227, 128
        %s229 = scalar_lea.vmem [#allocation3], %s228
        // Predicated region
        $region33: #{tpu_custom_call.1} parent=31 // pred_check
          %p230 = pneg %p65
        $region34: #{tpu_custom_call.1} parent=31 // pred_check_branch
          %232 = sbr.rel (%p230) target = $region36
        $region35: #{tpu_custom_call.1} parent=31 // pred_region
          %233 = dma.done %s226, 2048
        $region36: #{tpu_custom_call.1} parent=31 // pred_fallthru
          _
        %s234 = sand.u32 %s80, 1
        %s235 = scalar_lea.sflag [#allocation7], %s234
        %s236 = sand.u32 %s80, 1
        %s237 = smul.addr %s236, 128
        %s238 = scalar_lea.vmem [#allocation6], %s237
        // Predicated region
        $region37: #{tpu_custom_call.1} parent=31 // pred_check
          %p239 = pneg %p93
        $region38: #{tpu_custom_call.1} parent=31 // pred_check_branch
          %241 = sbr.rel (%p239) target = $region40
        $region39: #{tpu_custom_call.1} parent=31 // pred_region
          %242 = dma.done %s235, 2048
        $region40: #{tpu_custom_call.1} parent=31 // pred_fallthru
          _
        %s243 = sand.u32 %s52, 1
        %s244 = scalar_lea.sflag [#allocation4], %s243
        %s245 = sand.u32 %s52, 1
        %s246 = smul.addr %s245, 128
        %s247 = scalar_lea.vmem [#allocation3], %s246
        %p248 = pneg %p65
        %p249 = pneg %p62
        %s250 = sand.u32 %s80, 1
        %s251 = scalar_lea.sflag [#allocation7], %s250
        %s252 = sand.u32 %s80, 1
        %s253 = smul.addr %s252, 128
        %s254 = scalar_lea.vmem [#allocation6], %s253
        %p255 = pneg %p93
        %p256 = pneg %p90
        %p257 = scmp.lt.s32.totalorder %s29, 2
        %s258 = scalar_select %p257, %s29, 2
        %s259 = scalar_lea.vmem %s2, %s258
        %p260 = pneg %p119
        %p261 = pneg %p116
        %p262 = pneg %p147
        %p263 = pneg %p144
        %s264 = sand.u32 %s134, 1
        %s265 = scalar_lea.sflag [#allocation5], %s264
        %s266 = sand.u32 %s134, 1
        %s267 = smul.addr %s266, 128
        %s268 = scalar_lea.vmem [#allocation8], %s267
        %s269 = smul.u32 16, %s28
        %s270 = smul.u32 16, %s30
        %p271 = scmp.lt.s32.totalorder %s29, 2
        %s272 = scalar_select %p271, %s29, 2
        %s273 = scalar_lea.vmem %s2, %s272
        %s274 = smul.u32 16, %s28
        %p276 = scmp.eq.s32.totalorder %s30, 0
        // Predicated region
        $region41: #{tpu_custom_call.1} parent=31 // pred_check
          %p277 = pneg %p276
        $region42: #{tpu_custom_call.1} parent=31 // pred_check_branch
          %279 = sbr.rel (%p277) target = $region44
        $region43: #{tpu_custom_call.1} parent=31 // pred_region
          %280 = vst [vmem:[#allocation2] sm:$0xff] 0.0
          %281 = vst [vmem:[#allocation2 + $0x8] sm:$0xff] 0.0
          %282 = vst [vmem:[#allocation2 + $0x10] sm:$0xff] 0.0
          %283 = vst [vmem:[#allocation2 + $0x18] sm:$0xff] 0.0
          %284 = vst [vmem:[#allocation2 + $0x20] sm:$0xff] 0.0
          %285 = vst [vmem:[#allocation2 + $0x28] sm:$0xff] 0.0
          %286 = vst [vmem:[#allocation2 + $0x30] sm:$0xff] 0.0
          %287 = vst [vmem:[#allocation2 + $0x38] sm:$0xff] 0.0
          %288 = vst [vmem:[#allocation2 + $0x40] sm:$0xff] 0.0
          %289 = vst [vmem:[#allocation2 + $0x48] sm:$0xff] 0.0
          %290 = vst [vmem:[#allocation2 + $0x50] sm:$0xff] 0.0
          %291 = vst [vmem:[#allocation2 + $0x58] sm:$0xff] 0.0
          %292 = vst [vmem:[#allocation2 + $0x60] sm:$0xff] 0.0
          %293 = vst [vmem:[#allocation2 + $0x68] sm:$0xff] 0.0
          %294 = vst [vmem:[#allocation2 + $0x70] sm:$0xff] 0.0
          %295 = vst [vmem:[#allocation2 + $0x78] sm:$0xff] 0.0
        $region44: #{tpu_custom_call.1} parent=31 // pred_fallthru
          _
        %v296 = vld [vmem:[#allocation2] sm:$0xff]
        %v297 = vld [vmem:[#allocation2 + $0x8] sm:$0xff]
        %v298 = vld [vmem:[#allocation2 + $0x10] sm:$0xff]
        %v299 = vld [vmem:[#allocation2 + $0x18] sm:$0xff]
        %v300 = vld [vmem:[#allocation2 + $0x20] sm:$0xff]
        %v301 = vld [vmem:[#allocation2 + $0x28] sm:$0xff]
        %v302 = vld [vmem:[#allocation2 + $0x30] sm:$0xff]
        %v303 = vld [vmem:[#allocation2 + $0x38] sm:$0xff]
        %v304 = vld [vmem:[#allocation2 + $0x40] sm:$0xff]
        %v305 = vld [vmem:[#allocation2 + $0x48] sm:$0xff]
        %v306 = vld [vmem:[#allocation2 + $0x50] sm:$0xff]
        %v307 = vld [vmem:[#allocation2 + $0x58] sm:$0xff]
        %v308 = vld [vmem:[#allocation2 + $0x60] sm:$0xff]
        %v309 = vld [vmem:[#allocation2 + $0x68] sm:$0xff]
        %v310 = vld [vmem:[#allocation2 + $0x70] sm:$0xff]
        %v311 = vld [vmem:[#allocation2 + $0x78] sm:$0xff]
        %v312 = vld [vmem:[%s229] sm:$0xff]
        %v313 = vld [vmem:[%s229 + $0x8] sm:$0xff]
        %v314 = vld [vmem:[%s229 + $0x10] sm:$0xff]
        %v315 = vld [vmem:[%s229 + $0x18] sm:$0xff]
        %v316 = vld [vmem:[%s229 + $0x20] sm:$0xff]
        %v317 = vld [vmem:[%s229 + $0x28] sm:$0xff]
        %v318 = vld [vmem:[%s229 + $0x30] sm:$0xff]
        %v319 = vld [vmem:[%s229 + $0x38] sm:$0xff]
        %v320 = vld [vmem:[%s229 + $0x40] sm:$0xff]
        %v321 = vld [vmem:[%s229 + $0x48] sm:$0xff]
        %v322 = vld [vmem:[%s229 + $0x50] sm:$0xff]
        %v323 = vld [vmem:[%s229 + $0x58] sm:$0xff]
        %v324 = vld [vmem:[%s229 + $0x60] sm:$0xff]
        %v325 = vld [vmem:[%s229 + $0x68] sm:$0xff]
        %v326 = vld [vmem:[%s229 + $0x70] sm:$0xff]
        %v327 = vld [vmem:[%s229 + $0x78] sm:$0xff]
        %v328 = vpack.c.bf16 %v313, %v312
        %v329 = vpack.c.bf16 %v315, %v314
        %v330 = vpack.c.bf16 %v317, %v316
        %v331 = vpack.c.bf16 %v319, %v318
        %v332 = vpack.c.bf16 %v321, %v320
        %v333 = vpack.c.bf16 %v323, %v322
        %v334 = vpack.c.bf16 %v325, %v324
        %v335 = vpack.c.bf16 %v327, %v326
        %v336 = vld [vmem:[%s238] sm:$0xff]
        %v337 = vld [vmem:[%s238 + $0x8] sm:$0xff]
        %v338 = vld [vmem:[%s238 + $0x10] sm:$0xff]
        %v339 = vld [vmem:[%s238 + $0x18] sm:$0xff]
        %v340 = vld [vmem:[%s238 + $0x20] sm:$0xff]
        %v341 = vld [vmem:[%s238 + $0x28] sm:$0xff]
        %v342 = vld [vmem:[%s238 + $0x30] sm:$0xff]
        %v343 = vld [vmem:[%s238 + $0x38] sm:$0xff]
        %v344 = vld [vmem:[%s238 + $0x40] sm:$0xff]
        %v345 = vld [vmem:[%s238 + $0x48] sm:$0xff]
        %v346 = vld [vmem:[%s238 + $0x50] sm:$0xff]
        %v347 = vld [vmem:[%s238 + $0x58] sm:$0xff]
        %v348 = vld [vmem:[%s238 + $0x60] sm:$0xff]
        %v349 = vld [vmem:[%s238 + $0x68] sm:$0xff]
        %v350 = vld [vmem:[%s238 + $0x70] sm:$0xff]
        %v351 = vld [vmem:[%s238 + $0x78] sm:$0xff]
        %v352 = vpack.c.bf16 %v337, %v336
        %v353 = vpack.c.bf16 %v339, %v338
        %v354 = vpack.c.bf16 %v341, %v340
        %v355 = vpack.c.bf16 %v343, %v342
        %v356 = vpack.c.bf16 %v345, %v344
        %v357 = vpack.c.bf16 %v347, %v346
        %v358 = vpack.c.bf16 %v349, %v348
        %v359 = vpack.c.bf16 %v351, %v350
        %360 = vmatprep.subr.bf16.mxu0 0
        %361 = vmatpush1.bf16.msra.mxu0 %v359
        %362 = vmatprep.subr.bf16.mxu0 0
        %363 = vmatpush1.bf16.msra.mxu0 %v358
        %364 = vmatprep.subr.bf16.mxu0 0
        %365 = vmatpush1.bf16.msra.mxu0 %v357
        %366 = vmatprep.subr.bf16.mxu0 0
        %367 = vmatpush1.bf16.msra.mxu0 %v356
        %368 = vmatprep.subr.bf16.mxu0 0
        %369 = vmatpush1.bf16.msra.mxu0 %v355
        %370 = vmatprep.subr.bf16.mxu0 0
        %371 = vmatpush1.bf16.msra.mxu0 %v354
        %372 = vmatprep.subr.bf16.mxu0 0
        %373 = vmatpush1.bf16.msra.mxu0 %v353
        %374 = vmatprep.subr.bf16.mxu0 0
        %375 = vmatpush1.bf16.msra.mxu0 %v352
        %376 = vmatprep.subr.bf16.mxu0 0
        %377 = vmatpush2.bf16.msra.mxu0 0
        %378 = vmatprep.subr.bf16.mxu0 0
        %379 = vmatpush2.bf16.msra.mxu0 0
        %380 = vmatprep.subr.bf16.mxu0 0
        %381 = vmatpush2.bf16.msra.mxu0 0
        %382 = vmatprep.subr.bf16.mxu0 0
        %383 = vmatpush2.bf16.msra.mxu0 0
        %384 = vmatprep.subr.bf16.mxu0 0
        %385 = vmatpush2.bf16.msra.mxu0 0
        %386 = vmatprep.subr.bf16.mxu0 0
        %387 = vmatpush2.bf16.msra.mxu0 0
        %388 = vmatprep.subr.bf16.mxu0 0
        %389 = vmatpush2.bf16.msra.mxu0 0
        %390 = vmatprep.subr.bf16.mxu0 0
        %391 = vmatpush2.bf16.msra.mxu0 0
        %392 = vmatprep.mubr.bf16.mxu0 0
        %393 = vmatmul.mubr.bf16.gmra.mxu0 %v328
        %v394 = vpop.f32.mrf.mxu0
        %v395 = vadd.f32 0.0, %v394
        %v396 = vpop.f32.mrf.mxu0
        %v397 = vpop.f32.mrf.mxu0
        %v398 = vadd.f32 0.0, %v397
        %v399 = vpop.f32.mrf.mxu0
        %400 = vmatprep.mubr.bf16.mxu0 0
        %401 = vmatmul.mubr.bf16.gmra.mxu0 %v329
        %v402 = vpop.f32.mrf.mxu0
        %v403 = vadd.f32 0.0, %v402
        %v404 = vpop.f32.mrf.mxu0
        %v405 = vpop.f32.mrf.mxu0
        %v406 = vadd.f32 0.0, %v405
        %v407 = vpop.f32.mrf.mxu0
        %408 = vmatprep.mubr.bf16.mxu0 0
        %409 = vmatmul.mubr.bf16.gmra.mxu0 %v330
        %v410 = vpop.f32.mrf.mxu0
        %v411 = vadd.f32 0.0, %v410
        %v412 = vpop.f32.mrf.mxu0
        %v413 = vpop.f32.mrf.mxu0
        %v414 = vadd.f32 0.0, %v413
        %v415 = vpop.f32.mrf.mxu0
        %416 = vmatprep.mubr.bf16.mxu0 0
        %417 = vmatmul.mubr.bf16.gmra.mxu0 %v331
        %v418 = vpop.f32.mrf.mxu0
        %v419 = vadd.f32 0.0, %v418
        %v420 = vpop.f32.mrf.mxu0
        %v421 = vpop.f32.mrf.mxu0
        %v422 = vadd.f32 0.0, %v421
        %v423 = vpop.f32.mrf.mxu0
        %424 = vmatprep.mubr.bf16.mxu0 0
        %425 = vmatmul.mubr.bf16.gmra.mxu0 %v332
        %v426 = vpop.f32.mrf.mxu0
        %v427 = vadd.f32 0.0, %v426
        %v428 = vpop.f32.mrf.mxu0
        %v429 = vpop.f32.mrf.mxu0
        %v430 = vadd.f32 0.0, %v429
        %v431 = vpop.f32.mrf.mxu0
        %432 = vmatprep.mubr.bf16.mxu0 0
        %433 = vmatmul.mubr.bf16.gmra.mxu0 %v333
        %v434 = vpop.f32.mrf.mxu0
        %v435 = vadd.f32 0.0, %v434
        %v436 = vpop.f32.mrf.mxu0
        %v437 = vpop.f32.mrf.mxu0
        %v438 = vadd.f32 0.0, %v437
        %v439 = vpop.f32.mrf.mxu0
        %440 = vmatprep.mubr.bf16.mxu0 0
        %441 = vmatmul.mubr.bf16.gmra.mxu0 %v334
        %v442 = vpop.f32.mrf.mxu0
        %v443 = vadd.f32 0.0, %v442
        %v444 = vpop.f32.mrf.mxu0
        %v445 = vpop.f32.mrf.mxu0
        %v446 = vadd.f32 0.0, %v445
        %v447 = vpop.f32.mrf.mxu0
        %448 = vmatprep.mubr.bf16.mxu0 0
        %449 = vmatmul.mubr.bf16.gmra.mxu0 %v335
        %v450 = vpop.f32.mrf.mxu0
        %v451 = vadd.f32 0.0, %v450
        %v452 = vpop.f32.mrf.mxu0
        %v453 = vpop.f32.mrf.mxu0
        %v454 = vadd.f32 0.0, %v453
        %v455 = vpop.f32.mrf.mxu0
        %456 = vdwg.mxu0
        %v457 = vadd.f32 %v296, %v395
        %v458 = vadd.f32 %v297, %v398
        %v459 = vadd.f32 %v298, %v403
        %v460 = vadd.f32 %v299, %v406
        %v461 = vadd.f32 %v300, %v411
        %v462 = vadd.f32 %v301, %v414
        %v463 = vadd.f32 %v302, %v419
        %v464 = vadd.f32 %v303, %v422
        %v465 = vadd.f32 %v304, %v427
        %v466 = vadd.f32 %v305, %v430
        %v467 = vadd.f32 %v306, %v435
        %v468 = vadd.f32 %v307, %v438
        %v469 = vadd.f32 %v308, %v443
        %v470 = vadd.f32 %v309, %v446
        %v471 = vadd.f32 %v310, %v451
        %v472 = vadd.f32 %v311, %v454
        %473 = vst [vmem:[#allocation2] sm:$0xff] %v457
        %474 = vst [vmem:[#allocation2 + $0x8] sm:$0xff] %v458
        %475 = vst [vmem:[#allocation2 + $0x10] sm:$0xff] %v459
        %476 = vst [vmem:[#allocation2 + $0x18] sm:$0xff] %v460
        %477 = vst [vmem:[#allocation2 + $0x20] sm:$0xff] %v461
        %478 = vst [vmem:[#allocation2 + $0x28] sm:$0xff] %v462
        %479 = vst [vmem:[#allocation2 + $0x30] sm:$0xff] %v463
        %480 = vst [vmem:[#allocation2 + $0x38] sm:$0xff] %v464
        %481 = vst [vmem:[#allocation2 + $0x40] sm:$0xff] %v465
        %482 = vst [vmem:[#allocation2 + $0x48] sm:$0xff] %v466
        %483 = vst [vmem:[#allocation2 + $0x50] sm:$0xff] %v467
        %484 = vst [vmem:[#allocation2 + $0x58] sm:$0xff] %v468
        %485 = vst [vmem:[#allocation2 + $0x60] sm:$0xff] %v469
        %486 = vst [vmem:[#allocation2 + $0x68] sm:$0xff] %v470
        %487 = vst [vmem:[#allocation2 + $0x70] sm:$0xff] %v471
        %488 = vst [vmem:[#allocation2 + $0x78] sm:$0xff] %v472
        %p489 = scmp.eq.s32.totalorder %s30, 1
        // Predicated region
        $region45: #{tpu_custom_call.1} parent=31 // pred_check
          %p490 = pneg %p489
        $region46: #{tpu_custom_call.1} parent=31 // pred_check_branch
          %492 = sbr.rel (%p490) target = $region48
        $region47: #{tpu_custom_call.1} parent=31 // pred_region
          %v493 = vld [vmem:[#allocation2] sm:$0xff]
          %v494 = vld [vmem:[#allocation2 + $0x8] sm:$0xff]
          %v495 = vld [vmem:[#allocation2 + $0x10] sm:$0xff]
          %v496 = vld [vmem:[#allocation2 + $0x18] sm:$0xff]
          %v497 = vld [vmem:[#allocation2 + $0x20] sm:$0xff]
          %v498 = vld [vmem:[#allocation2 + $0x28] sm:$0xff]
          %v499 = vld [vmem:[#allocation2 + $0x30] sm:$0xff]
          %v500 = vld [vmem:[#allocation2 + $0x38] sm:$0xff]
          %v501 = vld [vmem:[#allocation2 + $0x40] sm:$0xff]
          %v502 = vld [vmem:[#allocation2 + $0x48] sm:$0xff]
          %v503 = vld [vmem:[#allocation2 + $0x50] sm:$0xff]
          %v504 = vld [vmem:[#allocation2 + $0x58] sm:$0xff]
          %v505 = vld [vmem:[#allocation2 + $0x60] sm:$0xff]
          %v506 = vld [vmem:[#allocation2 + $0x68] sm:$0xff]
          %v507 = vld [vmem:[#allocation2 + $0x70] sm:$0xff]
          %v508 = vld [vmem:[#allocation2 + $0x78] sm:$0xff]
          %v509 = vld [vmem:[%s273] sm:$0x1]
          %v511 = vlaneseq
          %v512 = vshrl.u32 %v511, 7
          %v513 = vsub.s32 0, %v512
          %v514 = vrot.slane %v509, %v513
          %v516 = vadd.f32 %v493, %v514
          %v517 = vadd.f32 %v494, %v514
          %v518 = vadd.f32 %v495, %v514
          %v519 = vadd.f32 %v496, %v514
          %v520 = vadd.f32 %v497, %v514
          %v521 = vadd.f32 %v498, %v514
          %v522 = vadd.f32 %v499, %v514
          %v523 = vadd.f32 %v500, %v514
          %v524 = vadd.f32 %v501, %v514
          %v525 = vadd.f32 %v502, %v514
          %v526 = vadd.f32 %v503, %v514
          %v527 = vadd.f32 %v504, %v514
          %v528 = vadd.f32 %v505, %v514
          %v529 = vadd.f32 %v506, %v514
          %v530 = vadd.f32 %v507, %v514
          %v531 = vadd.f32 %v508, %v514
          %v532 = vmax.f32 %v516, 0.0
          %v533 = vmax.f32 %v517, 0.0
          %v534 = vmax.f32 %v518, 0.0
          %v535 = vmax.f32 %v519, 0.0
          %v536 = vmax.f32 %v520, 0.0
          %v537 = vmax.f32 %v521, 0.0
          %v538 = vmax.f32 %v522, 0.0
          %v539 = vmax.f32 %v523, 0.0
          %v540 = vmax.f32 %v524, 0.0
          %v541 = vmax.f32 %v525, 0.0
          %v542 = vmax.f32 %v526, 0.0
          %v543 = vmax.f32 %v527, 0.0
          %v544 = vmax.f32 %v528, 0.0
          %v545 = vmax.f32 %v529, 0.0
          %v546 = vmax.f32 %v530, 0.0
          %v547 = vmax.f32 %v531, 0.0
          %548 = vst [vmem:[%s268] sm:$0xff] %v532
          %549 = vst [vmem:[%s268 + $0x8] sm:$0xff] %v533
          %550 = vst [vmem:[%s268 + $0x10] sm:$0xff] %v534
          %551 = vst [vmem:[%s268 + $0x18] sm:$0xff] %v535
          %552 = vst [vmem:[%s268 + $0x20] sm:$0xff] %v536
          %553 = vst [vmem:[%s268 + $0x28] sm:$0xff] %v537
          %554 = vst [vmem:[%s268 + $0x30] sm:$0xff] %v538
          %555 = vst [vmem:[%s268 + $0x38] sm:$0xff] %v539
          %556 = vst [vmem:[%s268 + $0x40] sm:$0xff] %v540
          %557 = vst [vmem:[%s268 + $0x48] sm:$0xff] %v541
          %558 = vst [vmem:[%s268 + $0x50] sm:$0xff] %v542
          %559 = vst [vmem:[%s268 + $0x58] sm:$0xff] %v543
          %560 = vst [vmem:[%s268 + $0x60] sm:$0xff] %v544
          %561 = vst [vmem:[%s268 + $0x68] sm:$0xff] %v545
          %562 = vst [vmem:[%s268 + $0x70] sm:$0xff] %v546
          %563 = vst [vmem:[%s268 + $0x78] sm:$0xff] %v547
        $region48: #{tpu_custom_call.1} parent=31 // pred_fallthru
          _
        %s564 = sand.u32 %s134, 1
        %s565 = scalar_lea.sflag [#allocation5], %s564
        %s566 = sand.u32 %s134, 1
        %s567 = smul.addr %s566, 128
        %s568 = scalar_lea.vmem [#allocation8], %s567
        // Predicated region
        $region49: #{tpu_custom_call.1} parent=31 // pred_check
          %p569 = pneg %p144
        $region50: #{tpu_custom_call.1} parent=31 // pred_check_branch
          %571 = sbr.rel (%p569) target = $region52
        $region51: #{tpu_custom_call.1} parent=31 // pred_region
          %s572 = smul.u32 16, %s28
          %s574 = ssub.s32 2048, 2048
          %575 = vsyncadd %s565, %s574
          %s576 = smul.addr %s572, 3
          %s577 = sadd.s32 %s29, %s576
          %s578 = smul.addr %s577, 128
          %s579 = scalar_lea.hbm %s3, %s578
          %s580 = sshll.u32 %s568, 4
          %s581 = int_to_ptr.vmem [resolvable:$true] %s580
          %586 = dma.vmem_to_hbm [thread:$0]  %s581, 2048, %s579, %s565, 128, 384, 8
        $region52: #{tpu_custom_call.1} parent=31 // pred_fallthru
          _
      $region32: #{tpu_custom_call.1} parent=5 // pred_fallthru
        _
      %p587 = scmp.le.s32.totalorder 2, %s18
      // Predicated region
      $region53: #{tpu_custom_call.1} parent=5 // pred_check
        %p588 = pneg %p587
      $region54: #{tpu_custom_call.1} parent=5 // pred_check_branch
        %590 = sbr.rel (%p588) target = $region56
      $region55: #{tpu_custom_call.1} parent=5 // pred_region
        %s591 = ssub.s32 %s18, 2
        // Predicated region
        $region57: #{tpu_custom_call.1} parent=55 // pred_check
          %p592 = pneg %p150
        $region58: #{tpu_custom_call.1} parent=55 // pred_check_branch
          %594 = sbr.rel (%p592) target = $region60
        $region59: #{tpu_custom_call.1} parent=55 // pred_region
          %s595 = sand.u32 %s135, 1
          %s596 = scalar_lea.sflag [#allocation5], %s595
          %s597 = sand.u32 %s135, 1
          %s598 = smul.addr %s597, 128
          %s599 = scalar_lea.vmem [#allocation8], %s598
          %600 = dma.done %s596, 2048
        $region60: #{tpu_custom_call.1} parent=55 // pred_fallthru
          _
      $region56: #{tpu_custom_call.1} parent=5 // pred_fallthru
        _
    $region6: #{tpu_custom_call.1} parent=1 // loop_footer
      %s22 = sadd.s32 1, %s18
    $region7: #{tpu_custom_call.1} parent=1 // loop_footer_branch
      %17 = sbr.rel target = $region3
    $region8: #{tpu_custom_call.1} parent=1 // loop_exit
      _
    %601 = vsyncpa [#allocation4], 1
    %s602 = scalar_lea.sflag [#allocation4], 1
    %603 = vsyncpa %s602, 1
    %604 = vsyncpa [#allocation7], 1
    %s605 = scalar_lea.sflag [#allocation7], 1
    %606 = vsyncpa %s605, 1
    %607 = vsyncpa [#allocation5], 1
    %s608 = scalar_lea.sflag [#allocation5], 1
    %609 = vsyncpa %s608, 1

</llo_original>
